<compile_context>
chip_gen: v7x
topology: tpu7x:2x2x1
jax: 0.10.0
libtpu: 0.0.40
codegen_flags: <defaults>
</compile_context>

<pallas_src>
import jax
import jax.numpy as jnp
from jax.experimental import pallas as pl
from jax.experimental.pallas import tpu as pltpu


_LANE = 128
_SUBLANE = 8


def _round_up(x, m):
    return (x + m - 1) // m * m


def _leaky_relu(x, negative_slope=0.01):
    # matches torch.nn.functional.leaky_relu default negative_slope=0.01
    return jnp.where(x >= 0, x, negative_slope * x)


def critic_kernel(x_ref, w1_ref, b1_ref, w2_ref, b2_ref, o_ref):
    # x_ref:  (TM, Dp)  activation dtype (tiled over the batch grid axis)
    # w1_ref: (Dp, Dp)  compute dtype (bf16 by default), resident across grid
    # b1_ref: (1, Dp)   f32
    # w2_ref: (Dp, Dp)  compute dtype, resident
    # b2_ref: (1, Dp)   f32
    # o_ref:  (TM, Dp)  activation dtype
    cdt = w1_ref.dtype

    x = x_ref[...].astype(cdt)  # no-op if x is already the compute dtype
    h = jnp.dot(x, w1_ref[...], preferred_element_type=jnp.float32) + b1_ref[...]
    h = _leaky_relu(h)  # elementwise kept in f32 (v5e has no bf16 VALU path)

    y = jnp.dot(h.astype(cdt), w2_ref[...], preferred_element_type=jnp.float32)
    y = _leaky_relu(y + b2_ref[...])

    o_ref[...] = y.astype(o_ref.dtype)  # single cast at the store


def critic_forward(x, w1_t, b1, w2_t, b2, *, compute_dtype=jnp.bfloat16,
                   batch_tile=None):
    """Fused Linear->LeakyReLU->Linear->LeakyReLU (Critic, do_classify=False).

    x:           (B, D)
    w1_t, w2_t:  (D, D) -- already transposed (in_dim, out_dim)
    b1, b2:      (D,)
    returns      (B, D) in x.dtype
    """
    B, D = x.shape
    Dp = _round_up(D, _LANE)

    # Batch tile: big enough to keep the MXU busy at realistic batch sizes,
    # padded to the sublane multiple at toy sizes.
    if batch_tile is None:
        if B >= 256:
            TM = 256
        elif B >= 128:
            TM = 128
        else:
            TM = _round_up(max(B, 1), _SUBLANE)
    else:
        TM = batch_tile
    Bp = _round_up(B, TM)

    w_itemsize = jnp.dtype(compute_dtype).itemsize
    x_itemsize = jnp.dtype(x.dtype).itemsize
    weights_vmem = 2 * Dp * Dp * w_itemsize + 2 * Dp * 4
    if weights_vmem > 48 * 1024 * 1024:
        # TODO(synk): add a K-tiled two-pass variant (f32 accumulator scratch,
        # pl.when init/finalize, reduction axis last/"arbitrary") for feature
        # dims whose resident weights do not fit v7x's 64 MiB VMEM.
        raise NotImplementedError(
            f"input_dim={D} needs ~{weights_vmem >> 20} MiB of resident "
            "weights; K-tiled fallback not implemented")

    io_vmem = 2 * 2 * TM * Dp * x_itemsize   # double-buffered x + out tiles
    scratch_vmem = 4 * TM * Dp * 4           # f32 intermediates headroom
    vmem_limit = int(min(max(2 * (weights_vmem + io_vmem + scratch_vmem),
                             16 << 20) + (4 << 20),
                         100 << 20))

    # Zero-pad to lane-dense tiles. Zero weight/bias padding keeps the padded
    # output columns at exactly leaky_relu(0) == 0, so the final slice is exact.
    xp = jnp.zeros((Bp, Dp), x.dtype).at[:B, :D].set(x)
    w1p = jnp.zeros((Dp, Dp), compute_dtype).at[:D, :D].set(
        w1_t.astype(compute_dtype))
    w2p = jnp.zeros((Dp, Dp), compute_dtype).at[:D, :D].set(
        w2_t.astype(compute_dtype))
    b1p = jnp.zeros((1, Dp), jnp.float32).at[0, :D].set(b1.astype(jnp.float32))
    b2p = jnp.zeros((1, Dp), jnp.float32).at[0, :D].set(b2.astype(jnp.float32))

    out = pl.pallas_call(
        critic_kernel,
        out_shape=jax.ShapeDtypeStruct((Bp, Dp), x.dtype),
        grid=(Bp // TM,),
        in_specs=[
            pl.BlockSpec((TM, Dp), lambda i: (i, 0)),   # x: tiled over batch
            pl.BlockSpec((Dp, Dp), lambda i: (0, 0)),   # w1: resident in VMEM
            pl.BlockSpec((1, Dp), lambda i: (0, 0)),    # b1: resident
            pl.BlockSpec((Dp, Dp), lambda i: (0, 0)),   # w2: resident
            pl.BlockSpec((1, Dp), lambda i: (0, 0)),    # b2: resident
        ],
        out_specs=pl.BlockSpec((TM, Dp), lambda i: (i, 0)),
        compiler_params=pltpu.CompilerParams(
            dimension_semantics=("parallel",),
            vmem_limit_bytes=vmem_limit),
    )(xp, w1p, b1p, w2p, b2p)
    return out[:B, :D]


def init_critic_params(key, input_dim):
    """Deterministic init mimicking nn.Linear's uniform(-1/sqrt(in), 1/sqrt(in))."""
    k1, k2, k3, k4 = jax.random.split(key, 4)
    bound = 1.0 / jnp.sqrt(jnp.float32(input_dim))
    # PyTorch Linear weight shape is (out, in); we store the transpose (in, out).
    w1 = jax.random.uniform(k1, (input_dim, input_dim), jnp.float32, -bound, bound)
    b1 = jax.random.uniform(k2, (input_dim,), jnp.float32, -bound, bound)
    w2 = jax.random.uniform(k3, (input_dim, input_dim), jnp.float32, -bound, bound)
    b2 = jax.random.uniform(k4, (input_dim,), jnp.float32, -bound, bound)
    return w1.T, b1, w2.T, b2


def critic_reference(x, w1_t, b1, w2_t, b2, compute_dtype=jnp.bfloat16):
    # Same rounding scheme as the kernel: bf16 matmul inputs, f32 accumulation,
    # f32 bias + LeakyReLU.
    cast = lambda a: a.astype(compute_dtype)
    h = _leaky_relu(
        jnp.dot(cast(x), cast(w1_t), preferred_element_type=jnp.float32) + b1)
    y = _leaky_relu(
        jnp.dot(cast(h), cast(w2_t), preferred_element_type=jnp.float32) + b2)
    return y


if __name__ == "__main__":
    key = jax.random.PRNGKey(0)
    k_x, k_p = jax.random.split(key)

    batch = 8
    input_dim = 32

    x = jax.random.normal(k_x, (batch, input_dim), jnp.float32)
    w1_t, b1, w2_t, b2 = init_critic_params(k_p, input_dim)

    out = critic_forward(x, w1_t, b1, w2_t, b2)
    out = jax.block_until_ready(out)

    ref = critic_reference(x, w1_t, b1, w2_t, b2)
    assert out.shape == (batch, input_dim)
    assert out.dtype == x.dtype
    assert jnp.allclose(out, ref, atol=1e-4, rtol=1e-4), "mismatch vs reference"

    print("KERNEL_OK")
</pallas_src>

<mosaic_0001>
module attributes {stable_mosaic.version = 11 : i64} {
  func.func @critic_kernel(%arg0: i32, %arg1: memref<8x128xf32, #tpu.memory_space<vmem>>, %arg2: memref<128x128xbf16, #tpu.memory_space<vmem>>, %arg3: memref<1x128xf32, #tpu.memory_space<vmem>>, %arg4: memref<128x128xbf16, #tpu.memory_space<vmem>>, %arg5: memref<1x128xf32, #tpu.memory_space<vmem>>, %arg6: memref<8x128xf32, #tpu.memory_space<vmem>>) attributes {dimension_semantics = [#tpu.dimension_semantics<parallel>], iteration_bounds = array<i64: 1>, scalar_prefetch = 0 : i64, scratch_operands = 0 : i64, tpu.core_type = #tpu.core_type<tc>, window_params = [{transform_indices = @transform_0, window_bounds = array<i64: 8, 128>}, {pipeline_mode = #tpu.pipeline_mode<synchronous>, transform_indices = @transform_1, window_bounds = array<i64: 128, 128>}, {pipeline_mode = #tpu.pipeline_mode<synchronous>, transform_indices = @transform_2, window_bounds = array<i64: 1, 128>}, {pipeline_mode = #tpu.pipeline_mode<synchronous>, transform_indices = @transform_3, window_bounds = array<i64: 128, 128>}, {pipeline_mode = #tpu.pipeline_mode<synchronous>, transform_indices = @transform_4, window_bounds = array<i64: 1, 128>}, {transform_indices = @transform_5, window_bounds = array<i64: 8, 128>}]} {
    %c0 = arith.constant 0 : index
    %c0_0 = arith.constant 0 : index
    %0 = vector.load %arg1[%c0, %c0_0] : memref<8x128xf32, #tpu.memory_space<vmem>>, vector<8x128xf32>
    %1 = arith.truncf %0 : vector<8x128xf32> to vector<8x128xbf16>
    %c0_1 = arith.constant 0 : index
    %c0_2 = arith.constant 0 : index
    %2 = vector.load %arg2[%c0_1, %c0_2] : memref<128x128xbf16, #tpu.memory_space<vmem>>, vector<128x128xbf16>
    %cst = arith.constant dense<0.000000e+00> : vector<8x128xf32>
    %3 = tpu.matmul %1, %2, %cst {dimension_numbers = #tpu.dot_dimension_numbers<[1], [0], [0], [1], [0, 0, 1, 1], [], []>} : vector<8x128xbf16>, vector<128x128xbf16>, vector<8x128xf32> -> vector<8x128xf32>
    %c0_3 = arith.constant 0 : index
    %c0_4 = arith.constant 0 : index
    %4 = vector.load %arg3[%c0_3, %c0_4] : memref<1x128xf32, #tpu.memory_space<vmem>>, vector<1x128xf32>
    %5 = vector.broadcast %4 : vector<1x128xf32> to vector<8x128xf32>
    %6 = arith.addf %3, %5 : vector<8x128xf32>
    %cst_5 = arith.constant 0.000000e+00 : f32
    %7 = vector.broadcast %cst_5 : f32 to vector<8x128xf32>
    %8 = arith.cmpf oge, %6, %7 : vector<8x128xf32>
    %cst_6 = arith.constant 0.00999999977 : f32
    %9 = vector.broadcast %cst_6 : f32 to vector<8x128xf32>
    %10 = arith.mulf %9, %6 : vector<8x128xf32>
    %11 = arith.select %8, %6, %10 : vector<8x128xi1>, vector<8x128xf32>
    %12 = arith.truncf %11 : vector<8x128xf32> to vector<8x128xbf16>
    %c0_7 = arith.constant 0 : index
    %c0_8 = arith.constant 0 : index
    %13 = vector.load %arg4[%c0_7, %c0_8] : memref<128x128xbf16, #tpu.memory_space<vmem>>, vector<128x128xbf16>
    %cst_9 = arith.constant dense<0.000000e+00> : vector<8x128xf32>
    %14 = tpu.matmul %12, %13, %cst_9 {dimension_numbers = #tpu.dot_dimension_numbers<[1], [0], [0], [1], [0, 0, 1, 1], [], []>} : vector<8x128xbf16>, vector<128x128xbf16>, vector<8x128xf32> -> vector<8x128xf32>
    %c0_10 = arith.constant 0 : index
    %c0_11 = arith.constant 0 : index
    %15 = vector.load %arg5[%c0_10, %c0_11] : memref<1x128xf32, #tpu.memory_space<vmem>>, vector<1x128xf32>
    %16 = vector.broadcast %15 : vector<1x128xf32> to vector<8x128xf32>
    %17 = arith.addf %14, %16 : vector<8x128xf32>
    %cst_12 = arith.constant 0.000000e+00 : f32
    %18 = vector.broadcast %cst_12 : f32 to vector<8x128xf32>
    %19 = arith.cmpf oge, %17, %18 : vector<8x128xf32>
    %cst_13 = arith.constant 0.00999999977 : f32
    %20 = vector.broadcast %cst_13 : f32 to vector<8x128xf32>
    %21 = arith.mulf %20, %17 : vector<8x128xf32>
    %22 = arith.select %19, %17, %21 : vector<8x128xi1>, vector<8x128xf32>
    %c0_14 = arith.constant 0 : index
    %c0_15 = arith.constant 0 : index
    %23 = vector.load %arg6[%c0_14, %c0_15] : memref<8x128xf32, #tpu.memory_space<vmem>>, vector<8x128xf32>
    tpu.vector_store %arg6[%c0_14, %c0_15], %22 {strides = array<i32>} : memref<8x128xf32, #tpu.memory_space<vmem>>, vector<8x128xf32>,
    return
  }
  func.func @transform_0(%arg0: i32) -> (i32, i32) {
    %c0_i32 = arith.constant 0 : i32
    %c0_i32_0 = arith.constant 0 : i32
    return %arg0, %c0_i32 : i32, i32
  }
  func.func @transform_1(%arg0: i32) -> (i32, i32) {
    %c0_i32 = arith.constant 0 : i32
    %c0_i32_0 = arith.constant 0 : i32
    %c0_i32_1 = arith.constant 0 : i32
    return %c0_i32, %c0_i32_0 : i32, i32
  }
  func.func @transform_2(%arg0: i32) -> (i32, i32) {
    %c0_i32 = arith.constant 0 : i32
    %c0_i32_0 = arith.constant 0 : i32
    %c0_i32_1 = arith.constant 0 : i32
    return %c0_i32, %c0_i32_0 : i32, i32
  }
  func.func @transform_3(%arg0: i32) -> (i32, i32) {
    %c0_i32 = arith.constant 0 : i32
    %c0_i32_0 = arith.constant 0 : i32
    %c0_i32_1 = arith.constant 0 : i32
    return %c0_i32, %c0_i32_0 : i32, i32
  }
  func.func @transform_4(%arg0: i32) -> (i32, i32) {
    %c0_i32 = arith.constant 0 : i32
    %c0_i32_0 = arith.constant 0 : i32
    %c0_i32_1 = arith.constant 0 : i32
    return %c0_i32, %c0_i32_0 : i32, i32
  }
  func.func @transform_5(%arg0: i32) -> (i32, i32) {
    %c0_i32 = arith.constant 0 : i32
    %c0_i32_0 = arith.constant 0 : i32
    return %arg0, %c0_i32 : i32, i32
  }
}

</mosaic_0001>

<llo_original>
// kernel: tpu_custom_call.1
$region0: #{tpu_custom_call.1}
  #allocation0 [shape = 'u32[]', space=smem, size = 0x4, offset = 0x4, fixed_abs, tag = 'smem constant byte address 0x4 - core index']
  #allocation1 [shape = 'u32[144,128]{1,0:T(1,128)}', space=vmem, size = 0x12000, scoped, tag = 'internal scratch']
  %s0 = inlined_call_operand.hbm [shape: f32[8,128], index: 0, kind: input, shape index: {}]
  %s1 = inlined_call_operand.hbm [shape: bf16[128,128], index: 1, kind: input, shape index: {}]
  %s2 = inlined_call_operand.vmem [shape: f32[1,128], index: 2, kind: input, shape index: {}]
  %s3 = inlined_call_operand.hbm [shape: bf16[128,128], index: 3, kind: input, shape index: {}]
  %s4 = inlined_call_operand.vmem [shape: f32[1,128], index: 4, kind: input, shape index: {}]
  %s5 = inlined_call_operand.hbm [shape: f32[8,128], index: 5, kind: output, shape index: {}]
  %s6 = sld [smem:[#allocation0]]
  $region42: #{tpu_custom_call.1} parent=0
    _
  %s8 = ssub.s32 1, %s6
  %s9 = scalar_select 0, %s8, %s6
  $region1: #{tpu_custom_call.1} parent=0
    #allocation2 [shape = 'u8[4096]{0}', space=vmem, size = 0x1000, scoped, tag = 'input window, operand 0, single buffered']
    #allocation3 [shape = 's32[1]{0}', space=sflag, size = 0x4, scoped, tag = 'scoped memory for tpu_custom_call.1']
    #allocation4 [shape = 's32[1]{0}', space=sflag, size = 0x4, scoped, tag = 'scoped memory for tpu_custom_call.1']
    #allocation5 [shape = 'u8[32768]{0}', space=vmem, size = 0x8000, scoped, tag = 'input window, operand 1, single buffered']
    #allocation6 [shape = 's32[1]{0}', space=sflag, size = 0x4, scoped, tag = 'scoped memory for tpu_custom_call.1']
    #allocation7 [shape = 'u8[32768]{0}', space=vmem, size = 0x8000, scoped, tag = 'input window, operand 3, single buffered']
    #allocation8 [shape = 'u8[4096]{0}', space=vmem, size = 0x1000, scoped, tag = 'output window, operand 0, single buffered']
    %10 = vsyncpa [#allocation3], 0
    %11 = vsyncpa [#allocation6], 0
    %12 = vsyncpa [#allocation4], 0
    // Predicated region
    $region2: #{tpu_custom_call.1} parent=1 // pred_check
      _
    $region3: #{tpu_custom_call.1} parent=1 // pred_check_branch
      %14 = sbr.rel (0) target = $region5
    $region4: #{tpu_custom_call.1} parent=1 // pred_region
      %s16 = ssub.s32 128, 128
      %17 = vsyncadd [#allocation3], %s16
      %s19 = sshll.u32 [#allocation2], 4
      %s20 = int_to_ptr.vmem [resolvable:$true] %s19
      %22 = dma.hbm_to_vmem [thread:$0]  %s0, 128, %s20, [#allocation3]
    $region5: #{tpu_custom_call.1} parent=1 // pred_fallthru
      _
    // Predicated region
    $region6: #{tpu_custom_call.1} parent=1 // pred_check
      _
    $region7: #{tpu_custom_call.1} parent=1 // pred_check_branch
      %24 = sbr.rel (0) target = $region9
    $region8: #{tpu_custom_call.1} parent=1 // pred_region
      %s26 = ssub.s32 1024, 1024
      %27 = vsyncadd [#allocation6], %s26
      %s28 = sshll.u32 [#allocation5], 4
      %s29 = int_to_ptr.vmem [resolvable:$true] %s28
      %34 = dma.hbm_to_vmem [thread:$0]  %s1, 1024, %s29, [#allocation6], 64, 64, 4
    $region9: #{tpu_custom_call.1} parent=1 // pred_fallthru
      _
    // Predicated region
    $region10: #{tpu_custom_call.1} parent=1 // pred_check
      _
    $region11: #{tpu_custom_call.1} parent=1 // pred_check_branch
      %36 = sbr.rel (0) target = $region13
    $region12: #{tpu_custom_call.1} parent=1 // pred_region
      _
    $region13: #{tpu_custom_call.1} parent=1 // pred_fallthru
      _
    // Predicated region
    $region14: #{tpu_custom_call.1} parent=1 // pred_check
      _
    $region15: #{tpu_custom_call.1} parent=1 // pred_check_branch
      %38 = sbr.rel (0) target = $region17
    $region16: #{tpu_custom_call.1} parent=1 // pred_region
      %s40 = ssub.s32 1024, 1024
      %41 = vsyncadd [#allocation6], %s40
      %s42 = sshll.u32 [#allocation7], 4
      %s43 = int_to_ptr.vmem [resolvable:$true] %s42
      %48 = dma.hbm_to_vmem [thread:$0]  %s3, 1024, %s43, [#allocation6], 64, 64, 4
    $region17: #{tpu_custom_call.1} parent=1 // pred_fallthru
      _
    // Predicated region
    $region18: #{tpu_custom_call.1} parent=1 // pred_check
      _
    $region19: #{tpu_custom_call.1} parent=1 // pred_check_branch
      %50 = sbr.rel (0) target = $region21
    $region20: #{tpu_custom_call.1} parent=1 // pred_region
      _
    $region21: #{tpu_custom_call.1} parent=1 // pred_fallthru
      _
    // Predicated region
    $region22: #{tpu_custom_call.1} parent=1 // pred_check
      _
    $region23: #{tpu_custom_call.1} parent=1 // pred_check_branch
      %52 = sbr.rel (0) target = $region25
    $region24: #{tpu_custom_call.1} parent=1 // pred_region
      %53 = dma.done [#allocation3], 128
    $region25: #{tpu_custom_call.1} parent=1 // pred_fallthru
      _
    // Predicated region
    $region26: #{tpu_custom_call.1} parent=1 // pred_check
      _
    $region27: #{tpu_custom_call.1} parent=1 // pred_check_branch
      %55 = sbr.rel (0) target = $region29
    $region28: #{tpu_custom_call.1} parent=1 // pred_region
      %56 = dma.done [#allocation6], 1024
    $region29: #{tpu_custom_call.1} parent=1 // pred_fallthru
      _
    // Predicated region
    $region30: #{tpu_custom_call.1} parent=1 // pred_check
      _
    $region31: #{tpu_custom_call.1} parent=1 // pred_check_branch
      %58 = sbr.rel (0) target = $region33
    $region32: #{tpu_custom_call.1} parent=1 // pred_region
      %59 = dma.done [#allocation6], 1024
    $region33: #{tpu_custom_call.1} parent=1 // pred_fallthru
      _
    %v61 = vld [vmem:[#allocation2] sm:$0xff]
    %v62 = vpack.c.bf16 %v61, %v61
    %v63 = vld [vmem:[#allocation5] sm:$0xf]
    %v64 = vld [vmem:[#allocation5 + $0x4] sm:$0xf]
    %v65 = vld [vmem:[#allocation5 + $0x8] sm:$0xf]
    %v66 = vld [vmem:[#allocation5 + $0xc] sm:$0xf]
    %v67 = vld [vmem:[#allocation5 + $0x10] sm:$0xf]
    %v68 = vld [vmem:[#allocation5 + $0x14] sm:$0xf]
    %v69 = vld [vmem:[#allocation5 + $0x18] sm:$0xf]
    %v70 = vld [vmem:[#allocation5 + $0x1c] sm:$0xf]
    %v71 = vld [vmem:[#allocation5 + $0x20] sm:$0xf]
    %v72 = vld [vmem:[#allocation5 + $0x24] sm:$0xf]
    %v73 = vld [vmem:[#allocation5 + $0x28] sm:$0xf]
    %v74 = vld [vmem:[#allocation5 + $0x2c] sm:$0xf]
    %v75 = vld [vmem:[#allocation5 + $0x30] sm:$0xf]
    %v76 = vld [vmem:[#allocation5 + $0x34] sm:$0xf]
    %v77 = vld [vmem:[#allocation5 + $0x38] sm:$0xf]
    %v78 = vld [vmem:[#allocation5 + $0x3c] sm:$0xf]
    %v79 = vld [vmem:[%s2] sm:$0x1]
    %v81 = vlaneseq
    %v82 = vshrl.u32 %v81, 7
    %v83 = vsub.s32 0, %v82
    %v84 = vrot.slane %v79, %v83
    %v102 = vunpack.c.l.b16 %v63
    %v103 = vunpack.c.l.b16 %v64
    %v104 = vunpack.c.l.b16 %v65
    %v105 = vunpack.c.l.b16 %v66
    %v106 = vunpack.c.l.b16 %v67
    %v107 = vunpack.c.l.b16 %v68
    %v108 = vunpack.c.l.b16 %v69
    %v109 = vunpack.c.l.b16 %v70
    %v110 = vunpack.c.l.b16 %v71
    %v111 = vunpack.c.l.b16 %v72
    %v112 = vunpack.c.l.b16 %v73
    %v113 = vunpack.c.l.b16 %v74
    %v114 = vunpack.c.l.b16 %v75
    %v115 = vunpack.c.l.b16 %v76
    %v116 = vunpack.c.l.b16 %v77
    %v117 = vunpack.c.l.b16 %v78
    %v118 = vpack.c.b16 %v103, %v102
    %v119 = vpack.c.b16 %v105, %v104
    %v120 = vpack.c.b16 %v107, %v106
    %v121 = vpack.c.b16 %v109, %v108
    %v122 = vpack.c.b16 %v111, %v110
    %v123 = vpack.c.b16 %v113, %v112
    %v124 = vpack.c.b16 %v115, %v114
    %v125 = vpack.c.b16 %v117, %v116
    %134 = vmatprep.subr.bf16.mxu0 0
    %135 = vmatpush1.bf16.msra.mxu0 %v118
    %136 = vmatprep.subr.bf16.mxu0 0
    %137 = vmatpush1.bf16.msra.mxu0 %v119
    %138 = vmatprep.subr.bf16.mxu0 0
    %139 = vmatpush1.bf16.msra.mxu0 %v120
    %140 = vmatprep.subr.bf16.mxu0 0
    %141 = vmatpush1.bf16.msra.mxu0 %v121
    %142 = vmatprep.subr.bf16.mxu0 0
    %143 = vmatpush1.bf16.msra.mxu0 %v122
    %144 = vmatprep.subr.bf16.mxu0 0
    %145 = vmatpush1.bf16.msra.mxu0 %v123
    %146 = vmatprep.subr.bf16.mxu0 0
    %147 = vmatpush1.bf16.msra.mxu0 %v124
    %148 = vmatprep.subr.bf16.mxu0 0
    %149 = vmatpush1.bf16.msra.mxu0 %v125
    %150 = vmatprep.subr.bf16.mxu0 0
    %151 = vmatpush1.bf16.msra.mxu0 0
    %152 = vmatprep.subr.bf16.mxu0 0
    %153 = vmatpush1.bf16.msra.mxu0 0
    %154 = vmatprep.subr.bf16.mxu0 0
    %155 = vmatpush1.bf16.msra.mxu0 0
    %156 = vmatprep.subr.bf16.mxu0 0
    %157 = vmatpush1.bf16.msra.mxu0 0
    %158 = vmatprep.subr.bf16.mxu0 0
    %159 = vmatpush1.bf16.msra.mxu0 0
    %160 = vmatprep.subr.bf16.mxu0 0
    %161 = vmatpush1.bf16.msra.mxu0 0
    %162 = vmatprep.subr.bf16.mxu0 0
    %163 = vmatpush1.bf16.msra.mxu0 0
    %164 = vmatprep.subr.bf16.mxu0 0
    %165 = vmatpush1.bf16.msra.mxu0 0
    %166 = vmatprep.mubr.bf16.mxu0 0
    %167 = vmatmul.mubr.bf16.gmra.mrb[0].mxu0 %v62
    %v168 = vpop.f32.mrb[0].mxu0
    %v169 = vadd.f32 %v84, %v168
    %v170 = vpop.f32.mrb[0].mxu0
    %v171 = vpop.f32.mrb[0].mxu0
    %v172 = vpop.f32.mrb[0].mxu0
    %173 = vdwg.mxu0
    %vm174 = vcmp.ge.f32.partialorder %v169, 0.0
    %v175 = vmul.f32 %v169, 0.01
    %v176 = vsel %vm174, %v169, %v175
    %v177 = vpack.c.bf16 %v176, %v176
    %v178 = vld [vmem:[#allocation7] sm:$0xf]
    %v179 = vld [vmem:[#allocation7 + $0x4] sm:$0xf]
    %v180 = vld [vmem:[#allocation7 + $0x8] sm:$0xf]
    %v181 = vld [vmem:[#allocation7 + $0xc] sm:$0xf]
    %v182 = vld [vmem:[#allocation7 + $0x10] sm:$0xf]
    %v183 = vld [vmem:[#allocation7 + $0x14] sm:$0xf]
    %v184 = vld [vmem:[#allocation7 + $0x18] sm:$0xf]
    %v185 = vld [vmem:[#allocation7 + $0x1c] sm:$0xf]
    %v186 = vld [vmem:[#allocation7 + $0x20] sm:$0xf]
    %v187 = vld [vmem:[#allocation7 + $0x24] sm:$0xf]
    %v188 = vld [vmem:[#allocation7 + $0x28] sm:$0xf]
    %v189 = vld [vmem:[#allocation7 + $0x2c] sm:$0xf]
    %v190 = vld [vmem:[#allocation7 + $0x30] sm:$0xf]
    %v191 = vld [vmem:[#allocation7 + $0x34] sm:$0xf]
    %v192 = vld [vmem:[#allocation7 + $0x38] sm:$0xf]
    %v193 = vld [vmem:[#allocation7 + $0x3c] sm:$0xf]
    %v194 = vld [vmem:[%s4] sm:$0x1]
    %v196 = vlaneseq
    %v197 = vshrl.u32 %v196, 7
    %v198 = vsub.s32 0, %v197
    %v199 = vrot.slane %v194, %v198
    %v217 = vunpack.c.l.b16 %v178
    %v218 = vunpack.c.l.b16 %v179
    %v219 = vunpack.c.l.b16 %v180
    %v220 = vunpack.c.l.b16 %v181
    %v221 = vunpack.c.l.b16 %v182
    %v222 = vunpack.c.l.b16 %v183
    %v223 = vunpack.c.l.b16 %v184
    %v224 = vunpack.c.l.b16 %v185
    %v225 = vunpack.c.l.b16 %v186
    %v226 = vunpack.c.l.b16 %v187
    %v227 = vunpack.c.l.b16 %v188
    %v228 = vunpack.c.l.b16 %v189
    %v229 = vunpack.c.l.b16 %v190
    %v230 = vunpack.c.l.b16 %v191
    %v231 = vunpack.c.l.b16 %v192
    %v232 = vunpack.c.l.b16 %v193
    %v233 = vpack.c.b16 %v218, %v217
    %v234 = vpack.c.b16 %v220, %v219
    %v235 = vpack.c.b16 %v222, %v221
    %v236 = vpack.c.b16 %v224, %v223
    %v237 = vpack.c.b16 %v226, %v225
    %v238 = vpack.c.b16 %v228, %v227
    %v239 = vpack.c.b16 %v230, %v229
    %v240 = vpack.c.b16 %v232, %v231
    %249 = vmatprep.subr.bf16.mxu0 0
    %250 = vmatpush1.bf16.msra.mxu0 %v233
    %251 = vmatprep.subr.bf16.mxu0 0
    %252 = vmatpush1.bf16.msra.mxu0 %v234
    %253 = vmatprep.subr.bf16.mxu0 0
    %254 = vmatpush1.bf16.msra.mxu0 %v235
    %255 = vmatprep.subr.bf16.mxu0 0
    %256 = vmatpush1.bf16.msra.mxu0 %v236
    %257 = vmatprep.subr.bf16.mxu0 0
    %258 = vmatpush1.bf16.msra.mxu0 %v237
    %259 = vmatprep.subr.bf16.mxu0 0
    %260 = vmatpush1.bf16.msra.mxu0 %v238
    %261 = vmatprep.subr.bf16.mxu0 0
    %262 = vmatpush1.bf16.msra.mxu0 %v239
    %263 = vmatprep.subr.bf16.mxu0 0
    %264 = vmatpush1.bf16.msra.mxu0 %v240
    %265 = vmatprep.subr.bf16.mxu0 0
    %266 = vmatpush1.bf16.msra.mxu0 0
    %267 = vmatprep.subr.bf16.mxu0 0
    %268 = vmatpush1.bf16.msra.mxu0 0
    %269 = vmatprep.subr.bf16.mxu0 0
    %270 = vmatpush1.bf16.msra.mxu0 0
    %271 = vmatprep.subr.bf16.mxu0 0
    %272 = vmatpush1.bf16.msra.mxu0 0
    %273 = vmatprep.subr.bf16.mxu0 0
    %274 = vmatpush1.bf16.msra.mxu0 0
    %275 = vmatprep.subr.bf16.mxu0 0
    %276 = vmatpush1.bf16.msra.mxu0 0
    %277 = vmatprep.subr.bf16.mxu0 0
    %278 = vmatpush1.bf16.msra.mxu0 0
    %279 = vmatprep.subr.bf16.mxu0 0
    %280 = vmatpush1.bf16.msra.mxu0 0
    %281 = vmatprep.mubr.bf16.mxu0 0
    %282 = vmatmul.mubr.bf16.gmra.mrb[0].mxu0 %v177
    %v283 = vpop.f32.mrb[0].mxu0
    %v284 = vadd.f32 %v199, %v283
    %v285 = vpop.f32.mrb[0].mxu0
    %v286 = vpop.f32.mrb[0].mxu0
    %v287 = vpop.f32.mrb[0].mxu0
    %288 = vdwg.mxu0
    %vm289 = vcmp.ge.f32.partialorder %v284, 0.0
    %v290 = vmul.f32 %v284, 0.01
    %v291 = vsel %vm289, %v284, %v290
    %292 = vst [vmem:[#allocation8] sm:$0xff] %v291
    // Predicated region
    $region34: #{tpu_custom_call.1} parent=1 // pred_check
      _
    $region35: #{tpu_custom_call.1} parent=1 // pred_check_branch
      %294 = sbr.rel (0) target = $region37
    $region36: #{tpu_custom_call.1} parent=1 // pred_region
      %s296 = ssub.s32 128, 128
      %297 = vsyncadd [#allocation4], %s296
      %s299 = sshll.u32 [#allocation8], 4
      %s300 = int_to_ptr.vmem [resolvable:$true] %s299
      %302 = dma.vmem_to_hbm [thread:$0]  %s300, 128, %s5, [#allocation4]
    $region37: #{tpu_custom_call.1} parent=1 // pred_fallthru
      _
    // Predicated region
    $region38: #{tpu_custom_call.1} parent=1 // pred_check
      _
    $region39: #{tpu_custom_call.1} parent=1 // pred_check_branch
      %304 = sbr.rel (0) target = $region41
    $region40: #{tpu_custom_call.1} parent=1 // pred_region
      %305 = dma.done [#allocation4], 128
    $region41: #{tpu_custom_call.1} parent=1 // pred_fallthru
      _
    %306 = vsyncpa [#allocation3], 1
    %307 = vsyncpa [#allocation6], 1
    %308 = vsyncpa [#allocation4], 1

</llo_original>
